<compile_context>
chip_gen: v7x
topology: tpu7x:2x2x1
jax: 0.10.0
libtpu: 0.0.40
codegen_flags: <defaults>
</compile_context>

<pallas_src>
import functools
import math

import jax
import jax.numpy as jnp
from jax import lax
from jax.experimental import pallas as pl
from jax.experimental.pallas import tpu as pltpu


def _embedding_kernel(seq_ref,            # SMEM scalar prefetch: (B*T,) token ids
                      tok_hbm,            # pl.ANY (HBM): (V, E) token table
                      cont_ref,           # VMEM: (Vcp, E) content table (resident)
                      pos_ref,            # VMEM: (tile_t, E) positional rows
                      cseq_ref,           # VMEM: (tile_t, C) int32 content ids
                      out_ref,            # VMEM: (tile_t, E) f32 output tile
                      tok_buf,            # VMEM scratch: (2, chunk, E) token rows
                      acc_ref,            # VMEM scratch: (tile_t, E) f32
                      sem,                # DMA semaphores, shape (2,)
                      *, T, C, tile_t, chunk):
    ti = pl.program_id(0)
    bi = pl.program_id(1)
    base = bi * T + ti * tile_t            # flat (B*T) row offset of this tile
    n_chunks = tile_t // chunk

    # ---- chunked token-row gather: issue `chunk` row DMAs into one slot -----
    def issue_chunk(cidx, slot):
        row0 = cidx * chunk
        dst = tok_buf.at[slot]

        def body(r, carry):
            tid = seq_ref[base + row0 + r]
            pltpu.make_async_copy(tok_hbm.at[pl.ds(tid, 1)],
                                  dst.at[pl.ds(r, 1)],
                                  sem.at[slot]).start()
            return carry

        if chunk % 8 == 0:
            lax.fori_loop(0, chunk, body, 0, unroll=8)
        else:
            lax.fori_loop(0, chunk, body, 0)

    # Prime the pipeline; the content/positional compute below overlaps with
    # chunk 0's DMAs.
    issue_chunk(0, 0)

    # ---- content sum via count-matrix MXU matmul (table is VMEM-resident) ---
    cids = cseq_ref[...]                                        # (tile_t, C) i32
    vcp = cont_ref.shape[0]
    iota = lax.broadcasted_iota(jnp.int32, (tile_t, vcp), 1)
    counts = jnp.zeros((tile_t, vcp), jnp.float32)
    for c in range(C):                                          # C small & static
        counts = counts + (cids[:, c:c + 1] == iota).astype(jnp.float32)
    content = jnp.dot(counts.astype(cont_ref.dtype), cont_ref[...],
                      preferred_element_type=jnp.float32)       # (tile_t, E) f32
    acc_ref[...] = pos_ref[...].astype(jnp.float32) + content

    # ---- double-buffered drain: issue chunk k+1 while storing chunk k -------
    for k in range(n_chunks):
        slot = k % 2
        if k + 1 < n_chunks:
            issue_chunk(k + 1, (k + 1) % 2)
        # One bulk wait retires all `chunk` row copies issued on this slot
        # (same total byte count as the individual (1, E) row descriptors).
        pltpu.make_async_copy(tok_hbm.at[pl.ds(0, chunk)],
                              tok_buf.at[slot],
                              sem.at[slot]).wait()
        rows = pl.ds(k * chunk, chunk)
        out_ref[rows, :] = tok_buf[slot].astype(jnp.float32) + acc_ref[rows, :]

    # TODO(synk): training-mode Dropout(p=0.1) not implemented; eval identity.


def bert_content_embedding(sequence, c_sequence, token_table, content_table,
                           pos_table, *, tile_t_max=256, chunk_max=64):
    """sequence (B,T) int, c_sequence (B,T,C) int -> (B,T,E) float32."""
    B, T = sequence.shape
    C = c_sequence.shape[-1]
    V, E = token_table.shape
    Vc = content_table.shape[0]
    assert E % 128 == 0, "embed_size must be a multiple of 128 (lane-dense out)"
    assert pos_table.shape[0] >= T and pos_table.shape[1] == E
    assert content_table.shape[1] == E

    # tile_t: largest multiple of 8 that divides T (<= tile_t_max), else T.
    tile_t = T
    for cand in range(min(tile_t_max, T), 7, -1):
        if cand % 8 == 0 and T % cand == 0:
            tile_t = cand
            break
    # Keep the grid from collapsing to one step so both v7x TCs get work.
    while (B * (T // tile_t) < 2 and tile_t >= 16
           and (tile_t // 2) % 8 == 0 and T % (tile_t // 2) == 0):
        tile_t //= 2

    # chunk: largest multiple of 8 that divides tile_t (<= chunk_max), else tile_t.
    chunk = tile_t
    for cand in range(min(chunk_max, tile_t), 7, -1):
        if cand % 8 == 0 and tile_t % cand == 0:
            chunk = cand
            break
    assert tile_t % chunk == 0
    assert V >= chunk, "vocab must be >= chunk (bulk-wait descriptor source)"

    # Clamp ids so malformed inputs cannot become out-of-bounds HBM DMAs.
    seq_flat = jnp.clip(sequence.reshape(B * T).astype(jnp.int32), 0, V - 1)
    cseq_i32 = jnp.clip(c_sequence.astype(jnp.int32), 0, Vc - 1)

    # Pad the tiny content table to a 128-row multiple (clean MXU contraction).
    vcp = ((Vc + 127) // 128) * 128
    cont_padded = jnp.pad(content_table, ((0, vcp - Vc), (0, 0)))

    # Explicit VMEM budget -> vmem_limit_bytes (keeps v7x's 64 MiB honest).
    tok_b = jnp.dtype(token_table.dtype).itemsize
    cont_b = jnp.dtype(content_table.dtype).itemsize
    vmem_bytes = (2 * tile_t * E * 4          # pos block (double-buffered)
                  + 2 * tile_t * E * 4        # out block
                  + 2 * tile_t * 128 * 4      # cseq block (lane-padded)
                  + 2 * vcp * E * cont_b      # content table block
                  + 2 * chunk * E * tok_b     # token-row double buffer
                  + tile_t * E * 4)           # acc scratch
    vmem_limit = int(min(64 * 2**20, max(32 * 2**20, 2 * vmem_bytes)))

    kern = functools.partial(_embedding_kernel, T=T, C=C, tile_t=tile_t,
                             chunk=chunk)

    out = pl.pallas_call(
        kern,
        out_shape=jax.ShapeDtypeStruct((B, T, E), jnp.float32),
        grid_spec=pltpu.PrefetchScalarGridSpec(
            num_scalar_prefetch=1,
            grid=(T // tile_t, B),
            in_specs=[
                pl.BlockSpec(memory_space=pl.ANY),                  # token table (HBM)
                pl.BlockSpec((vcp, E), lambda ti, bi, seq: (0, 0)),  # content table
                pl.BlockSpec((tile_t, E), lambda ti, bi, seq: (ti, 0)),     # pos rows
                pl.BlockSpec((None, tile_t, C),
                             lambda ti, bi, seq: (bi, ti, 0)),              # content ids
            ],
            out_specs=pl.BlockSpec((None, tile_t, E),
                                   lambda ti, bi, seq: (bi, ti, 0)),
            scratch_shapes=[
                pltpu.VMEM((2, chunk, E), token_table.dtype),
                pltpu.VMEM((tile_t, E), jnp.float32),
                pltpu.SemaphoreType.DMA((2,)),
            ],
        ),
        compiler_params=pltpu.CompilerParams(
            dimension_semantics=("parallel", "parallel"),
            vmem_limit_bytes=vmem_limit),
    )(seq_flat, token_table, cont_padded, pos_table[:T], cseq_i32)
    return out


def make_sinusoidal_pe(max_len, d_model):
    position = jnp.arange(max_len, dtype=jnp.float32)[:, None]
    div_term = jnp.exp(jnp.arange(0, d_model, 2, dtype=jnp.float32)
                       * -(math.log(10000.0) / d_model))
    pe = jnp.zeros((max_len, d_model), jnp.float32)
    pe = pe.at[:, 0::2].set(jnp.sin(position * div_term))
    pe = pe.at[:, 1::2].set(jnp.cos(position * div_term))
    return pe


if __name__ == "__main__":
    # Small deterministic config (E chosen lane-dense = 128).
    vocab_size, content_size, embed_size, max_len = 24, 6, 128, 16
    B, T, C = 2, 8, 3

    key = jax.random.PRNGKey(0)
    k_tok, k_cont, k_seq, k_cseq = jax.random.split(key, 4)

    # Embedding tables (nn.Embedding with padding_idx=0 -> row 0 is zeros).
    token_table = jax.random.normal(k_tok, (vocab_size, embed_size), jnp.float32)
    token_table = token_table.at[0].set(0.0)
    content_table = jax.random.normal(k_cont, (content_size, embed_size),
                                      jnp.float32)
    content_table = content_table.at[0].set(0.0)
    pos_table = make_sinusoidal_pe(max_len, embed_size)

    # Example inputs (valid ids only).
    sequence = jax.random.randint(k_seq, (B, T), 0, vocab_size, dtype=jnp.int32)
    c_sequence = jax.random.randint(k_cseq, (B, T, C), 0, content_size,
                                    dtype=jnp.int32)

    out = bert_content_embedding(sequence, c_sequence, token_table,
                                 content_table, pos_table)
    out = jax.block_until_ready(out)

    # Plain-JAX reference (same semantics as the PyTorch forward, eval mode).
    ref = (token_table[sequence]
           + pos_table[:T][None, :, :]
           + content_table[c_sequence].sum(axis=2))
    assert out.shape == (B, T, embed_size)
    assert jnp.allclose(out, ref, atol=1e-4, rtol=1e-4), float(
        jnp.max(jnp.abs(out - ref)))

    print("KERNEL_OK")
</pallas_src>

<mosaic_0001>
module attributes {stable_mosaic.version = 11 : i64} {
  func.func @_embedding_kernel(%arg0: i32, %arg1: i32, %arg2: memref<16xi32, #tpu.memory_space<smem>>, %arg3: memref<24x128xf32, #tpu.memory_space<any>>, %arg4: memref<128x128xf32, #tpu.memory_space<vmem>>, %arg5: memref<8x128xf32, #tpu.memory_space<vmem>>, %arg6: memref<1x8x3xi32, #tpu.memory_space<vmem>>, %arg7: memref<1x8x128xf32, #tpu.memory_space<vmem>>, %arg8: memref<2x8x128xf32, #tpu.memory_space<vmem>>, %arg9: memref<8x128xf32, #tpu.memory_space<vmem>>, %arg10: memref<2x!tpu.dma_semaphore, #tpu.memory_space<semaphore_mem>>) attributes {dimension_semantics = [#tpu.dimension_semantics<parallel>, #tpu.dimension_semantics<parallel>], iteration_bounds = array<i64: 1, 2>, scalar_prefetch = 1 : i64, scratch_operands = 3 : i64, tpu.core_type = #tpu.core_type<tc>, window_params = [{}, {pipeline_mode = #tpu.pipeline_mode<synchronous>, transform_indices = @transform_1, window_bounds = array<i64: 128, 128>}, {transform_indices = @transform_2, window_bounds = array<i64: 8, 128>}, {transform_indices = @transform_3, window_bounds = array<i64: 1, 8, 3>}, {transform_indices = @transform_4, window_bounds = array<i64: 1, 8, 128>}]} {
    %c8_i32 = arith.constant 8 : i32
    %0 = arith.muli %arg1, %c8_i32 : i32
    %c8_i32_0 = arith.constant 8 : i32
    %1 = arith.muli %arg0, %c8_i32_0 : i32
    %2 = arith.addi %0, %1 : i32
    %c0_i32 = arith.constant 0 : i32
    %c0_i32_1 = arith.constant 0 : i32
    %c0_i32_2 = arith.constant 0 : i32
    %3 = arith.addi %2, %c0_i32_2 : i32
    %4 = arith.addi %3, %c0_i32_1 : i32
    %5 = arith.index_cast %4 : i32 to index
    %6 = memref.load %arg2[%5] : memref<16xi32, #tpu.memory_space<smem>>
    %c0_i32_3 = arith.constant 0 : i32
    %c0_i32_4 = arith.constant 0 : i32
    %7 = tpu.memref_slice %arg3[%6, %c0_i32_4] : memref<24x128xf32, #tpu.memory_space<any>> -> memref<1x128xf32, #tpu.memory_space<any>>
    %c0_i32_5 = arith.constant 0 : i32
    %c0_i32_6 = arith.constant 0 : i32
    %8 = tpu.memref_slice %arg8[%c0_i32, %c0_i32_5, %c0_i32_6] : memref<2x8x128xf32, #tpu.memory_space<vmem>> -> memref<1x8x128xf32, #tpu.memory_space<vmem>>
    %9 = tpu.memref_squeeze %8 : memref<1x8x128xf32, #tpu.memory_space<vmem>> -> memref<8x128xf32, #tpu.memory_space<vmem>>
    %c0_i32_7 = arith.constant 0 : i32
    %10 = tpu.memref_slice %9[%c0_i32_1, %c0_i32_7] : memref<8x128xf32, #tpu.memory_space<vmem>> -> memref<1x128xf32, #tpu.memory_space<vmem>>
    %11 = tpu.memref_slice %arg10[%c0_i32_3] : memref<2x!tpu.dma_semaphore, #tpu.memory_space<semaphore_mem>> -> memref<1x!tpu.dma_semaphore, #tpu.memory_space<semaphore_mem>>
    %12 = tpu.memref_squeeze %11 : memref<1x!tpu.dma_semaphore, #tpu.memory_space<semaphore_mem>> -> memref<!tpu.dma_semaphore, #tpu.memory_space<semaphore_mem>>
    tpu.enqueue_dma source(%7 : memref<1x128xf32, #tpu.memory_space<any>>) target(%10 : memref<1x128xf32, #tpu.memory_space<vmem>>) target_semaphore(%12 : memref<!tpu.dma_semaphore, #tpu.memory_space<semaphore_mem>>)
    %c1_i32 = arith.constant 1 : i32
    %c0_i32_8 = arith.constant 0 : i32
    %13 = arith.addi %2, %c0_i32_8 : i32
    %14 = arith.addi %13, %c1_i32 : i32
    %15 = arith.index_cast %14 : i32 to index
    %16 = memref.load %arg2[%15] : memref<16xi32, #tpu.memory_space<smem>>
    %c0_i32_9 = arith.constant 0 : i32
    %c0_i32_10 = arith.constant 0 : i32
    %17 = tpu.memref_slice %arg3[%16, %c0_i32_10] : memref<24x128xf32, #tpu.memory_space<any>> -> memref<1x128xf32, #tpu.memory_space<any>>
    %c0_i32_11 = arith.constant 0 : i32
    %c0_i32_12 = arith.constant 0 : i32
    %18 = tpu.memref_slice %arg8[%c0_i32, %c0_i32_11, %c0_i32_12] : memref<2x8x128xf32, #tpu.memory_space<vmem>> -> memref<1x8x128xf32, #tpu.memory_space<vmem>>
    %19 = tpu.memref_squeeze %18 : memref<1x8x128xf32, #tpu.memory_space<vmem>> -> memref<8x128xf32, #tpu.memory_space<vmem>>
    %c0_i32_13 = arith.constant 0 : i32
    %20 = tpu.memref_slice %19[%c1_i32, %c0_i32_13] : memref<8x128xf32, #tpu.memory_space<vmem>> -> memref<1x128xf32, #tpu.memory_space<vmem>>
    %21 = tpu.memref_slice %arg10[%c0_i32_9] : memref<2x!tpu.dma_semaphore, #tpu.memory_space<semaphore_mem>> -> memref<1x!tpu.dma_semaphore, #tpu.memory_space<semaphore_mem>>
    %22 = tpu.memref_squeeze %21 : memref<1x!tpu.dma_semaphore, #tpu.memory_space<semaphore_mem>> -> memref<!tpu.dma_semaphore, #tpu.memory_space<semaphore_mem>>
    tpu.enqueue_dma source(%17 : memref<1x128xf32, #tpu.memory_space<any>>) target(%20 : memref<1x128xf32, #tpu.memory_space<vmem>>) target_semaphore(%22 : memref<!tpu.dma_semaphore, #tpu.memory_space<semaphore_mem>>)
    %c2_i32 = arith.constant 2 : i32
    %c0_i32_14 = arith.constant 0 : i32
    %23 = arith.addi %2, %c0_i32_14 : i32
    %24 = arith.addi %23, %c2_i32 : i32
    %25 = arith.index_cast %24 : i32 to index
    %26 = memref.load %arg2[%25] : memref<16xi32, #tpu.memory_space<smem>>
    %c0_i32_15 = arith.constant 0 : i32
    %c0_i32_16 = arith.constant 0 : i32
    %27 = tpu.memref_slice %arg3[%26, %c0_i32_16] : memref<24x128xf32, #tpu.memory_space<any>> -> memref<1x128xf32, #tpu.memory_space<any>>
    %c0_i32_17 = arith.constant 0 : i32
    %c0_i32_18 = arith.constant 0 : i32
    %28 = tpu.memref_slice %arg8[%c0_i32, %c0_i32_17, %c0_i32_18] : memref<2x8x128xf32, #tpu.memory_space<vmem>> -> memref<1x8x128xf32, #tpu.memory_space<vmem>>
    %29 = tpu.memref_squeeze %28 : memref<1x8x128xf32, #tpu.memory_space<vmem>> -> memref<8x128xf32, #tpu.memory_space<vmem>>
    %c0_i32_19 = arith.constant 0 : i32
    %30 = tpu.memref_slice %29[%c2_i32, %c0_i32_19] : memref<8x128xf32, #tpu.memory_space<vmem>> -> memref<1x128xf32, #tpu.memory_space<vmem>>
    %31 = tpu.memref_slice %arg10[%c0_i32_15] : memref<2x!tpu.dma_semaphore, #tpu.memory_space<semaphore_mem>> -> memref<1x!tpu.dma_semaphore, #tpu.memory_space<semaphore_mem>>
    %32 = tpu.memref_squeeze %31 : memref<1x!tpu.dma_semaphore, #tpu.memory_space<semaphore_mem>> -> memref<!tpu.dma_semaphore, #tpu.memory_space<semaphore_mem>>
    tpu.enqueue_dma source(%27 : memref<1x128xf32, #tpu.memory_space<any>>) target(%30 : memref<1x128xf32, #tpu.memory_space<vmem>>) target_semaphore(%32 : memref<!tpu.dma_semaphore, #tpu.memory_space<semaphore_mem>>)
    %c3_i32 = arith.constant 3 : i32
    %c0_i32_20 = arith.constant 0 : i32
    %33 = arith.addi %2, %c0_i32_20 : i32
    %34 = arith.addi %33, %c3_i32 : i32
    %35 = arith.index_cast %34 : i32 to index
    %36 = memref.load %arg2[%35] : memref<16xi32, #tpu.memory_space<smem>>
    %c0_i32_21 = arith.constant 0 : i32
    %c0_i32_22 = arith.constant 0 : i32
    %37 = tpu.memref_slice %arg3[%36, %c0_i32_22] : memref<24x128xf32, #tpu.memory_space<any>> -> memref<1x128xf32, #tpu.memory_space<any>>
    %c0_i32_23 = arith.constant 0 : i32
    %c0_i32_24 = arith.constant 0 : i32
    %38 = tpu.memref_slice %arg8[%c0_i32, %c0_i32_23, %c0_i32_24] : memref<2x8x128xf32, #tpu.memory_space<vmem>> -> memref<1x8x128xf32, #tpu.memory_space<vmem>>
    %39 = tpu.memref_squeeze %38 : memref<1x8x128xf32, #tpu.memory_space<vmem>> -> memref<8x128xf32, #tpu.memory_space<vmem>>
    %c0_i32_25 = arith.constant 0 : i32
    %40 = tpu.memref_slice %39[%c3_i32, %c0_i32_25] : memref<8x128xf32, #tpu.memory_space<vmem>> -> memref<1x128xf32, #tpu.memory_space<vmem>>
    %41 = tpu.memref_slice %arg10[%c0_i32_21] : memref<2x!tpu.dma_semaphore, #tpu.memory_space<semaphore_mem>> -> memref<1x!tpu.dma_semaphore, #tpu.memory_space<semaphore_mem>>
    %42 = tpu.memref_squeeze %41 : memref<1x!tpu.dma_semaphore, #tpu.memory_space<semaphore_mem>> -> memref<!tpu.dma_semaphore, #tpu.memory_space<semaphore_mem>>
    tpu.enqueue_dma source(%37 : memref<1x128xf32, #tpu.memory_space<any>>) target(%40 : memref<1x128xf32, #tpu.memory_space<vmem>>) target_semaphore(%42 : memref<!tpu.dma_semaphore, #tpu.memory_space<semaphore_mem>>)
    %c4_i32 = arith.constant 4 : i32
    %c0_i32_26 = arith.constant 0 : i32
    %43 = arith.addi %2, %c0_i32_26 : i32
    %44 = arith.addi %43, %c4_i32 : i32
    %45 = arith.index_cast %44 : i32 to index
    %46 = memref.load %arg2[%45] : memref<16xi32, #tpu.memory_space<smem>>
    %c0_i32_27 = arith.constant 0 : i32
    %c0_i32_28 = arith.constant 0 : i32
    %47 = tpu.memref_slice %arg3[%46, %c0_i32_28] : memref<24x128xf32, #tpu.memory_space<any>> -> memref<1x128xf32, #tpu.memory_space<any>>
    %c0_i32_29 = arith.constant 0 : i32
    %c0_i32_30 = arith.constant 0 : i32
    %48 = tpu.memref_slice %arg8[%c0_i32, %c0_i32_29, %c0_i32_30] : memref<2x8x128xf32, #tpu.memory_space<vmem>> -> memref<1x8x128xf32, #tpu.memory_space<vmem>>
    %49 = tpu.memref_squeeze %48 : memref<1x8x128xf32, #tpu.memory_space<vmem>> -> memref<8x128xf32, #tpu.memory_space<vmem>>
    %c0_i32_31 = arith.constant 0 : i32
    %50 = tpu.memref_slice %49[%c4_i32, %c0_i32_31] : memref<8x128xf32, #tpu.memory_space<vmem>> -> memref<1x128xf32, #tpu.memory_space<vmem>>
    %51 = tpu.memref_slice %arg10[%c0_i32_27] : memref<2x!tpu.dma_semaphore, #tpu.memory_space<semaphore_mem>> -> memref<1x!tpu.dma_semaphore, #tpu.memory_space<semaphore_mem>>
    %52 = tpu.memref_squeeze %51 : memref<1x!tpu.dma_semaphore, #tpu.memory_space<semaphore_mem>> -> memref<!tpu.dma_semaphore, #tpu.memory_space<semaphore_mem>>
    tpu.enqueue_dma source(%47 : memref<1x128xf32, #tpu.memory_space<any>>) target(%50 : memref<1x128xf32, #tpu.memory_space<vmem>>) target_semaphore(%52 : memref<!tpu.dma_semaphore, #tpu.memory_space<semaphore_mem>>)
    %c5_i32 = arith.constant 5 : i32
    %c0_i32_32 = arith.constant 0 : i32
    %53 = arith.addi %2, %c0_i32_32 : i32
    %54 = arith.addi %53, %c5_i32 : i32
    %55 = arith.index_cast %54 : i32 to index
    %56 = memref.load %arg2[%55] : memref<16xi32, #tpu.memory_space<smem>>
    %c0_i32_33 = arith.constant 0 : i32
    %c0_i32_34 = arith.constant 0 : i32
    %57 = tpu.memref_slice %arg3[%56, %c0_i32_34] : memref<24x128xf32, #tpu.memory_space<any>> -> memref<1x128xf32, #tpu.memory_space<any>>
    %c0_i32_35 = arith.constant 0 : i32
    %c0_i32_36 = arith.constant 0 : i32
    %58 = tpu.memref_slice %arg8[%c0_i32, %c0_i32_35, %c0_i32_36] : memref<2x8x128xf32, #tpu.memory_space<vmem>> -> memref<1x8x128xf32, #tpu.memory_space<vmem>>
    %59 = tpu.memref_squeeze %58 : memref<1x8x128xf32, #tpu.memory_space<vmem>> -> memref<8x128xf32, #tpu.memory_space<vmem>>
    %c0_i32_37 = arith.constant 0 : i32
    %60 = tpu.memref_slice %59[%c5_i32, %c0_i32_37] : memref<8x128xf32, #tpu.memory_space<vmem>> -> memref<1x128xf32, #tpu.memory_space<vmem>>
    %61 = tpu.memref_slice %arg10[%c0_i32_33] : memref<2x!tpu.dma_semaphore, #tpu.memory_space<semaphore_mem>> -> memref<1x!tpu.dma_semaphore, #tpu.memory_space<semaphore_mem>>
    %62 = tpu.memref_squeeze %61 : memref<1x!tpu.dma_semaphore, #tpu.memory_space<semaphore_mem>> -> memref<!tpu.dma_semaphore, #tpu.memory_space<semaphore_mem>>
    tpu.enqueue_dma source(%57 : memref<1x128xf32, #tpu.memory_space<any>>) target(%60 : memref<1x128xf32, #tpu.memory_space<vmem>>) target_semaphore(%62 : memref<!tpu.dma_semaphore, #tpu.memory_space<semaphore_mem>>)
    %c6_i32 = arith.constant 6 : i32
    %c0_i32_38 = arith.constant 0 : i32
    %63 = arith.addi %2, %c0_i32_38 : i32
    %64 = arith.addi %63, %c6_i32 : i32
    %65 = arith.index_cast %64 : i32 to index
    %66 = memref.load %arg2[%65] : memref<16xi32, #tpu.memory_space<smem>>
    %c0_i32_39 = arith.constant 0 : i32
    %c0_i32_40 = arith.constant 0 : i32
    %67 = tpu.memref_slice %arg3[%66, %c0_i32_40] : memref<24x128xf32, #tpu.memory_space<any>> -> memref<1x128xf32, #tpu.memory_space<any>>
    %c0_i32_41 = arith.constant 0 : i32
    %c0_i32_42 = arith.constant 0 : i32
    %68 = tpu.memref_slice %arg8[%c0_i32, %c0_i32_41, %c0_i32_42] : memref<2x8x128xf32, #tpu.memory_space<vmem>> -> memref<1x8x128xf32, #tpu.memory_space<vmem>>
    %69 = tpu.memref_squeeze %68 : memref<1x8x128xf32, #tpu.memory_space<vmem>> -> memref<8x128xf32, #tpu.memory_space<vmem>>
    %c0_i32_43 = arith.constant 0 : i32
    %70 = tpu.memref_slice %69[%c6_i32, %c0_i32_43] : memref<8x128xf32, #tpu.memory_space<vmem>> -> memref<1x128xf32, #tpu.memory_space<vmem>>
    %71 = tpu.memref_slice %arg10[%c0_i32_39] : memref<2x!tpu.dma_semaphore, #tpu.memory_space<semaphore_mem>> -> memref<1x!tpu.dma_semaphore, #tpu.memory_space<semaphore_mem>>
    %72 = tpu.memref_squeeze %71 : memref<1x!tpu.dma_semaphore, #tpu.memory_space<semaphore_mem>> -> memref<!tpu.dma_semaphore, #tpu.memory_space<semaphore_mem>>
    tpu.enqueue_dma source(%67 : memref<1x128xf32, #tpu.memory_space<any>>) target(%70 : memref<1x128xf32, #tpu.memory_space<vmem>>) target_semaphore(%72 : memref<!tpu.dma_semaphore, #tpu.memory_space<semaphore_mem>>)
    %c7_i32 = arith.constant 7 : i32
    %c0_i32_44 = arith.constant 0 : i32
    %73 = arith.addi %2, %c0_i32_44 : i32
    %74 = arith.addi %73, %c7_i32 : i32
    %75 = arith.index_cast %74 : i32 to index
    %76 = memref.load %arg2[%75] : memref<16xi32, #tpu.memory_space<smem>>
    %c0_i32_45 = arith.constant 0 : i32
    %c0_i32_46 = arith.constant 0 : i32
    %77 = tpu.memref_slice %arg3[%76, %c0_i32_46] : memref<24x128xf32, #tpu.memory_space<any>> -> memref<1x128xf32, #tpu.memory_space<any>>
    %c0_i32_47 = arith.constant 0 : i32
    %c0_i32_48 = arith.constant 0 : i32
    %78 = tpu.memref_slice %arg8[%c0_i32, %c0_i32_47, %c0_i32_48] : memref<2x8x128xf32, #tpu.memory_space<vmem>> -> memref<1x8x128xf32, #tpu.memory_space<vmem>>
    %79 = tpu.memref_squeeze %78 : memref<1x8x128xf32, #tpu.memory_space<vmem>> -> memref<8x128xf32, #tpu.memory_space<vmem>>
    %c0_i32_49 = arith.constant 0 : i32
    %80 = tpu.memref_slice %79[%c7_i32, %c0_i32_49] : memref<8x128xf32, #tpu.memory_space<vmem>> -> memref<1x128xf32, #tpu.memory_space<vmem>>
    %81 = tpu.memref_slice %arg10[%c0_i32_45] : memref<2x!tpu.dma_semaphore, #tpu.memory_space<semaphore_mem>> -> memref<1x!tpu.dma_semaphore, #tpu.memory_space<semaphore_mem>>
    %82 = tpu.memref_squeeze %81 : memref<1x!tpu.dma_semaphore, #tpu.memory_space<semaphore_mem>> -> memref<!tpu.dma_semaphore, #tpu.memory_space<semaphore_mem>>
    tpu.enqueue_dma source(%77 : memref<1x128xf32, #tpu.memory_space<any>>) target(%80 : memref<1x128xf32, #tpu.memory_space<vmem>>) target_semaphore(%82 : memref<!tpu.dma_semaphore, #tpu.memory_space<semaphore_mem>>)
    %c8_i32_50 = arith.constant 8 : i32
    %c0 = arith.constant 0 : index
    %c0_51 = arith.constant 0 : index
    %c0_52 = arith.constant 0 : index
    %83 = vector.load %arg6[%c0, %c0_51, %c0_52] : memref<1x8x3xi32, #tpu.memory_space<vmem>>, vector<1x8x3xi32>
    %84 = vector.shape_cast %83 : vector<1x8x3xi32> to vector<8x3xi32>
    %85 = tpu.iota {dimensions = array<i32: 1>} : vector<8x128xi32>
    %cst = arith.constant 0.000000e+00 : f32
    %86 = vector.broadcast %cst : f32 to vector<8x128xf32>
    %87 = vector.extract_strided_slice %84 {offsets = [0, 0], sizes = [8, 1], strides = [1, 1]} : vector<8x3xi32> to vector<8x1xi32>
    %88 = vector.broadcast %87 : vector<8x1xi32> to vector<8x128xi32>
    %89 = arith.cmpi eq, %88, %85 : vector<8x128xi32>
    %90 = arith.extui %89 : vector<8x128xi1> to vector<8x128xi32>
    %91 = arith.sitofp %90 : vector<8x128xi32> to vector<8x128xf32>
    %92 = arith.addf %86, %91 : vector<8x128xf32>
    %93 = vector.extract_strided_slice %84 {offsets = [0, 1], sizes = [8, 1], strides = [1, 1]} : vector<8x3xi32> to vector<8x1xi32>
    %94 = vector.broadcast %93 : vector<8x1xi32> to vector<8x128xi32>
    %95 = arith.cmpi eq, %94, %85 : vector<8x128xi32>
    %96 = arith.extui %95 : vector<8x128xi1> to vector<8x128xi32>
    %97 = arith.sitofp %96 : vector<8x128xi32> to vector<8x128xf32>
    %98 = arith.addf %92, %97 : vector<8x128xf32>
    %99 = vector.extract_strided_slice %84 {offsets = [0, 2], sizes = [8, 1], strides = [1, 1]} : vector<8x3xi32> to vector<8x1xi32>
    %100 = vector.broadcast %99 : vector<8x1xi32> to vector<8x128xi32>
    %101 = arith.cmpi eq, %100, %85 : vector<8x128xi32>
    %102 = arith.extui %101 : vector<8x128xi1> to vector<8x128xi32>
    %103 = arith.sitofp %102 : vector<8x128xi32> to vector<8x128xf32>
    %104 = arith.addf %98, %103 : vector<8x128xf32>
    %c0_53 = arith.constant 0 : index
    %c0_54 = arith.constant 0 : index
    %105 = vector.load %arg4[%c0_53, %c0_54] : memref<128x128xf32, #tpu.memory_space<vmem>>, vector<128x128xf32>
    %cst_55 = arith.constant dense<0.000000e+00> : vector<8x128xf32>
    %106 = tpu.matmul %104, %105, %cst_55 {dimension_numbers = #tpu.dot_dimension_numbers<[1], [0], [0], [1], [0, 0, 1, 1], [], []>} : vector<8x128xf32>, vector<128x128xf32>, vector<8x128xf32> -> vector<8x128xf32>
    %c0_56 = arith.constant 0 : index
    %c0_57 = arith.constant 0 : index
    %107 = vector.load %arg5[%c0_56, %c0_57] : memref<8x128xf32, #tpu.memory_space<vmem>>, vector<8x128xf32>
    %108 = arith.addf %107, %106 : vector<8x128xf32>
    %c0_58 = arith.constant 0 : index
    %c0_59 = arith.constant 0 : index
    %109 = vector.load %arg9[%c0_58, %c0_59] : memref<8x128xf32, #tpu.memory_space<vmem>>, vector<8x128xf32>
    tpu.vector_store %arg9[%c0_58, %c0_59], %108 {strides = array<i32>} : memref<8x128xf32, #tpu.memory_space<vmem>>, vector<8x128xf32>,
    %c0_i32_60 = arith.constant 0 : i32
    %c0_i32_61 = arith.constant 0 : i32
    %c0_i32_62 = arith.constant 0 : i32
    %c0_i32_63 = arith.constant 0 : i32
    %110 = tpu.memref_slice %arg3[%c0_i32_62, %c0_i32_63] : memref<24x128xf32, #tpu.memory_space<any>> -> memref<8x128xf32, #tpu.memory_space<any>>
    %c0_i32_64 = arith.constant 0 : i32
    %c0_i32_65 = arith.constant 0 : i32
    %111 = tpu.memref_slice %arg8[%c0_i32_60, %c0_i32_64, %c0_i32_65] : memref<2x8x128xf32, #tpu.memory_space<vmem>> -> memref<1x8x128xf32, #tpu.memory_space<vmem>>
    %112 = tpu.memref_squeeze %111 : memref<1x8x128xf32, #tpu.memory_space<vmem>> -> memref<8x128xf32, #tpu.memory_space<vmem>>
    %113 = tpu.memref_slice %arg10[%c0_i32_61] : memref<2x!tpu.dma_semaphore, #tpu.memory_space<semaphore_mem>> -> memref<1x!tpu.dma_semaphore, #tpu.memory_space<semaphore_mem>>
    %114 = tpu.memref_squeeze %113 : memref<1x!tpu.dma_semaphore, #tpu.memory_space<semaphore_mem>> -> memref<!tpu.dma_semaphore, #tpu.memory_space<semaphore_mem>>
    tpu.wait_dma2 semaphore(%114 : memref<!tpu.dma_semaphore, #tpu.memory_space<semaphore_mem>>) src(%110 : memref<8x128xf32, #tpu.memory_space<any>>) dst(%112 : memref<8x128xf32, #tpu.memory_space<vmem>>)
    %c0_66 = arith.constant 0 : index
    %c0_67 = arith.constant 0 : index
    %c0_68 = arith.constant 0 : index
    %115 = vector.load %arg8[%c0_66, %c0_67, %c0_68] : memref<2x8x128xf32, #tpu.memory_space<vmem>>, vector<1x8x128xf32>
    %116 = vector.shape_cast %115 : vector<1x8x128xf32> to vector<8x128xf32>
    %c0_69 = arith.constant 0 : index
    %c0_70 = arith.constant 0 : index
    %117 = vector.load %arg9[%c0_69, %c0_70] : memref<8x128xf32, #tpu.memory_space<vmem>>, vector<8x128xf32>
    %118 = arith.addf %116, %117 : vector<8x128xf32>
    %c0_71 = arith.constant 0 : index
    %c0_72 = arith.constant 0 : index
    %c0_73 = arith.constant 0 : index
    %119 = vector.load %arg7[%c0_71, %c0_72, %c0_73] : memref<1x8x128xf32, #tpu.memory_space<vmem>>, vector<1x8x128xf32>
    %120 = vector.shape_cast %119 : vector<1x8x128xf32> to vector<8x128xf32>
    %121 = vector.shape_cast %118 : vector<8x128xf32> to vector<1x8x128xf32>
    tpu.vector_store %arg7[%c0_71, %c0_72, %c0_73], %121 {strides = array<i32>} : memref<1x8x128xf32, #tpu.memory_space<vmem>>, vector<1x8x128xf32>,
    return
  }
  func.func @transform_1(%arg0: i32, %arg1: i32, %arg2: memref<16xi32, #tpu.memory_space<smem>>) -> (i32, i32) {
    %c0_i32 = arith.constant 0 : i32
    %c0_i32_0 = arith.constant 0 : i32
    %c0_i32_1 = arith.constant 0 : i32
    return %c0_i32, %c0_i32_0 : i32, i32
  }
  func.func @transform_2(%arg0: i32, %arg1: i32, %arg2: memref<16xi32, #tpu.memory_space<smem>>) -> (i32, i32) {
    %c0_i32 = arith.constant 0 : i32
    %c0_i32_0 = arith.constant 0 : i32
    return %arg0, %c0_i32 : i32, i32
  }
  func.func @transform_3(%arg0: i32, %arg1: i32, %arg2: memref<16xi32, #tpu.memory_space<smem>>) -> (i32, i32, i32) {
    %c0_i32 = arith.constant 0 : i32
    %c0_i32_0 = arith.constant 0 : i32
    return %arg1, %arg0, %c0_i32 : i32, i32, i32
  }
  func.func @transform_4(%arg0: i32, %arg1: i32, %arg2: memref<16xi32, #tpu.memory_space<smem>>) -> (i32, i32, i32) {
    %c0_i32 = arith.constant 0 : i32
    %c0_i32_0 = arith.constant 0 : i32
    return %arg1, %arg0, %c0_i32 : i32, i32, i32
  }
}

</mosaic_0001>

<llo_original>
// kernel: tpu_custom_call.1
$region0: #{tpu_custom_call.1}
  #allocation0 [shape = 'u32[]', space=smem, size = 0x4, offset = 0x4, fixed_abs, tag = 'smem constant byte address 0x4 - core index']
  #allocation1 [shape = 'u32[144,128]{1,0:T(1,128)}', space=vmem, size = 0x12000, scoped, tag = 'internal scratch']
  #allocation2 [shape = 'f32[2,8,128]{2,1,0:T(8,128)}', space=vmem, size = 0x2000, scoped, tag = 'scratch operand']
  #allocation3 [shape = 'f32[8,128]{1,0:T(8,128)}', space=vmem, size = 0x1000, scoped, tag = 'scratch operand']
  #allocation4 [shape = 's32[2]{0}', space=sflag, size = 0x8, scoped, tag = 'scratch operand']
  #allocation5 [shape = 's32[1]{0}', space=sflag, size = 0x4, scoped, tag = 'scoped memory for tpu_custom_call.1']
  #allocation6 [shape = 'u8[512]{0}', space=smem, size = 0x200, scoped, tag = 'prefetched SMEM operand 0']
  #allocation11 [shape = 's32[]', space=sflag, size = 0x4, offset = 0, fixed_abs, tag = 'sflag constant byte address 0x0 - dummy sync flag']
  #allocation12 [shape = 's32[]', space=sflag, size = 0x4, offset = 0, fixed_abs, tag = 'sflag constant byte address 0x0 - dummy sync flag']
  #allocation13 [shape = 's32[]', space=sflag, size = 0x4, offset = 0, fixed_abs, tag = 'sflag constant byte address 0x0 - dummy sync flag']
  #allocation14 [shape = 's32[]', space=sflag, size = 0x4, offset = 0, fixed_abs, tag = 'sflag constant byte address 0x0 - dummy sync flag']
  #allocation15 [shape = 's32[]', space=sflag, size = 0x4, offset = 0, fixed_abs, tag = 'sflag constant byte address 0x0 - dummy sync flag']
  #allocation16 [shape = 's32[]', space=sflag, size = 0x4, offset = 0, fixed_abs, tag = 'sflag constant byte address 0x0 - dummy sync flag']
  #allocation17 [shape = 's32[]', space=sflag, size = 0x4, offset = 0, fixed_abs, tag = 'sflag constant byte address 0x0 - dummy sync flag']
  #allocation18 [shape = 's32[]', space=sflag, size = 0x4, offset = 0, fixed_abs, tag = 'sflag constant byte address 0x0 - dummy sync flag']
  %s0 = inlined_call_operand.vmem [shape: s32[16], index: 0, kind: input, shape index: {}]
  %s1 = inlined_call_operand.vmem [shape: f32[24,128], index: 1, kind: input, shape index: {}]
  %s2 = inlined_call_operand.hbm [shape: f32[128,128], index: 2, kind: input, shape index: {}]
  %s3 = inlined_call_operand.vmem [shape: f32[8,128], index: 3, kind: input, shape index: {}]
  %s4 = inlined_call_operand.vmem [shape: s32[2,8,3], index: 4, kind: input, shape index: {}]
  %s5 = inlined_call_operand.hbm [shape: f32[2,8,128], index: 5, kind: output, shape index: {}]
  %s6 = sld [smem:[#allocation0]]
  $region289: #{tpu_custom_call.1} parent=0
    _
  %s8 = ssub.s32 1, %s6
  %s9 = scalar_select 0, %s8, %s6
  %s10 = sshll.u32 %s0, 4
  %s11 = int_to_ptr.vmem [resolvable:$true] %s10
  %13 = dma.vmem_to_smem %s11, 16, [#allocation6], [#allocation5]
  %14 = dma.done [#allocation5], 16
  %15 = sfence
  $region1: #{tpu_custom_call.1} parent=0
    #allocation7 [shape = 'u8[65536]{0}', space=vmem, size = 0x10000, scoped, tag = 'input window, operand 2, single buffered']
    #allocation8 [shape = 's32[2]{0}', space=sflag, size = 0x8, scoped, tag = 'scoped memory for tpu_custom_call.1']
    #allocation9 [shape = 's32[2]{0}', space=sflag, size = 0x8, scoped, tag = 'scoped memory for tpu_custom_call.1']
    #allocation10 [shape = 'u8[8192]{0}', space=vmem, size = 0x2000, scoped, tag = 'output window, operand 0']
    %16 = vsyncpa [#allocation8], 0
    %17 = vsyncpa [#allocation9], 0
    %s18 = scalar_lea.sflag [#allocation9], 1
    %19 = vsyncpa %s18, 0
    loop: start=0, step=1, limit=4
    $region2: #{tpu_custom_call.1} parent=1 // loop_pre_header
      _
    $region3: #{tpu_custom_call.1} parent=1 // loop_header
      %s21 = sphi 0, %s25
      %p22 = scmp.ge.s32.totalorder %s21, 4
      %s28 = sphi 0, %s40
      %s29 = sphi 0, %s36
      %s30 = sphi 0, %s28
      %s31 = sphi 0, %s29
      %s32 = sphi 0, %s30
      %s33 = sphi 0, %s31
      %s41 = sphi 0, %s41
      %s43 = sphi 0, %s41
      %s44 = sphi 0, %s43
      %s58 = sphi 0, %s44
      %s64 = sphi 0, %s66
      %s67 = sphi 0, %s64
      %s68 = sphi 0, %s67
      %s84 = sphi 0, %s68
      %s92 = sphi 0, %s94
      %s95 = sphi 0, %s92
      %s96 = sphi 0, %s95
      %s112 = sphi 0, %s96
      %s120 = sphi 0, %s122
      %s123 = sphi 0, %s120
      %s124 = sphi 0, %s123
      %s140 = sphi 0, %s124
    $region4: #{tpu_custom_call.1} parent=1 // loop_header_branch
      %24 = sbr.rel (%p22) target = $region8
    $region5: #{tpu_custom_call.1} parent=1 // loop_body
      %s26 = ssub.s32 %s21, 1
      %s27 = ssub.s32 %s21, 2
      %s34 = sadd.s32 1, %s29
      %p35 = scmp.ge.s32.totalorder %s34, 2
      %s36 = scalar_select %p35, 0, %s34
      %s37 = sadd.s32 1, %s28
      %s38 = scalar_select %p35, %s37, %s28
      %p39 = scmp.ge.s32.totalorder %s38, 1
      %s40 = scalar_select %p39, 0, %s38
      %s42 = sadd.s32 %s41, 1
      %p45 = scmp.eq.s32.totalorder %s21, 1
      %p46 = scmp.ne.s32.totalorder %s41, %s43
      %p47 = scmp.eq.s32.totalorder %s21, 0
      %p48 = por %p46, %p47
      %p49 = scmp.ne.s32.totalorder %s41, %s43
      %p50 = scmp.eq.s32.totalorder %s26, 1
      %p51 = por %p49, %p50
      %p52 = scmp.ne.s32.totalorder %s43, %s44
      %p53 = scmp.eq.s32.totalorder %s26, 0
      %p54 = por %p52, %p53
      %p55 = scmp.ne.s32.totalorder %s43, %s44
      %p56 = scmp.eq.s32.totalorder %s27, 1
      %p57 = por %p55, %p56
      %p59 = scmp.ne.s32.totalorder %s44, %s58
      %p60 = scmp.eq.s32.totalorder %s27, 0
      %p61 = por %p59, %p60
      %s62 = ssub.s32 %s28, %s40
      %p63 = scmp.eq.s32.totalorder %s62, 0
      %s65 = sadd.s32 %s64, 1
      %s66 = scalar_select %p63, %s64, %s65
      %p69 = pneg %p63
      %p70 = scmp.eq.s32.totalorder %s21, 1
      %p71 = por %p69, %p70
      %p72 = scmp.ne.s32.totalorder %s64, %s67
      %p73 = scmp.eq.s32.totalorder %s21, 0
      %p74 = por %p72, %p73
      %p75 = scmp.ne.s32.totalorder %s64, %s67
      %p76 = scmp.eq.s32.totalorder %s26, 1
      %p77 = por %p75, %p76
      %p78 = scmp.ne.s32.totalorder %s67, %s68
      %p79 = scmp.eq.s32.totalorder %s26, 0
      %p80 = por %p78, %p79
      %p81 = scmp.ne.s32.totalorder %s67, %s68
      %p82 = scmp.eq.s32.totalorder %s27, 1
      %p83 = por %p81, %p82
      %p85 = scmp.ne.s32.totalorder %s68, %s84
      %p86 = scmp.eq.s32.totalorder %s27, 0
      %p87 = por %p85, %p86
      %s88 = ssub.s32 %s29, %s36
      %s89 = ssub.s32 %s28, %s40
      %s90 = sor.u32 %s88, %s89
      %p91 = scmp.eq.s32.totalorder %s90, 0
      %s93 = sadd.s32 %s92, 1
      %s94 = scalar_select %p91, %s92, %s93
      %p97 = pneg %p91
      %p98 = scmp.eq.s32.totalorder %s21, 1
      %p99 = por %p97, %p98
      %p100 = scmp.ne.s32.totalorder %s92, %s95
      %p101 = scmp.eq.s32.totalorder %s21, 0
      %p102 = por %p100, %p101
      %p103 = scmp.ne.s32.totalorder %s92, %s95
      %p104 = scmp.eq.s32.totalorder %s26, 1
      %p105 = por %p103, %p104
      %p106 = scmp.ne.s32.totalorder %s95, %s96
      %p107 = scmp.eq.s32.totalorder %s26, 0
      %p108 = por %p106, %p107
      %p109 = scmp.ne.s32.totalorder %s95, %s96
      %p110 = scmp.eq.s32.totalorder %s27, 1
      %p111 = por %p109, %p110
      %p113 = scmp.ne.s32.totalorder %s96, %s112
      %p114 = scmp.eq.s32.totalorder %s27, 0
      %p115 = por %p113, %p114
      %s116 = ssub.s32 %s29, %s36
      %s117 = ssub.s32 %s28, %s40
      %s118 = sor.u32 %s116, %s117
      %p119 = scmp.eq.s32.totalorder %s118, 0
      %s121 = sadd.s32 %s120, 1
      %s122 = scalar_select %p119, %s120, %s121
      %p125 = pneg %p119
      %p126 = scmp.eq.s32.totalorder %s21, 1
      %p127 = por %p125, %p126
      %p128 = scmp.ne.s32.totalorder %s120, %s123
      %p129 = scmp.eq.s32.totalorder %s21, 0
      %p130 = por %p128, %p129
      %p131 = scmp.ne.s32.totalorder %s120, %s123
      %p132 = scmp.eq.s32.totalorder %s26, 1
      %p133 = por %p131, %p132
      %p134 = scmp.ne.s32.totalorder %s123, %s124
      %p135 = scmp.eq.s32.totalorder %s26, 0
      %p136 = por %p134, %p135
      %p137 = scmp.ne.s32.totalorder %s123, %s124
      %p138 = scmp.eq.s32.totalorder %s27, 1
      %p139 = por %p137, %p138
      %p141 = scmp.ne.s32.totalorder %s124, %s140
      %p142 = scmp.eq.s32.totalorder %s27, 0
      %p143 = por %p141, %p142
      %p144 = scmp.le.s32.totalorder 1, %s21
      %p145 = scmp.lt.s32.totalorder %s21, 3
      %p146 = pnand %p144, %p145
      %p147 = pneg %p146
      // Predicated region
      $region9: #{tpu_custom_call.1} parent=5 // pred_check
        _
      $region10: #{tpu_custom_call.1} parent=5 // pred_check_branch
        %149 = sbr.rel (%p146) target = $region12
      $region11: #{tpu_custom_call.1} parent=5 // pred_region
        %s150 = ssub.s32 %s21, 1
        // Predicated region
        $region13: #{tpu_custom_call.1} parent=11 // pred_check
          %p151 = pneg %p54
        $region14: #{tpu_custom_call.1} parent=11 // pred_check_branch
          %153 = sbr.rel (%p151) target = $region16
        $region15: #{tpu_custom_call.1} parent=11 // pred_region
          %s155 = ssub.s32 2048, 2048
          %156 = vsyncadd [#allocation8], %s155
          %s157 = sshll.u32 [#allocation7], 4
          %s158 = int_to_ptr.vmem [resolvable:$true] %s157
          %163 = dma.hbm_to_vmem [thread:$0]  %s2, 2048, %s158, [#allocation8], 128, 128, 8
        $region16: #{tpu_custom_call.1} parent=11 // pred_fallthru
          _
        // Predicated region
        $region17: #{tpu_custom_call.1} parent=11 // pred_check
          %p164 = pneg %p80
        $region18: #{tpu_custom_call.1} parent=11 // pred_check_branch
          %166 = sbr.rel (%p164) target = $region20
        $region19: #{tpu_custom_call.1} parent=11 // pred_region
          %p167 = scmp.lt.s32.totalorder %s30, 0
          %s168 = scalar_select %p167, %s30, 0
          %s169 = smul.addr %s168, 8
          %s170 = scalar_lea.vmem %s3, %s169
        $region20: #{tpu_custom_call.1} parent=11 // pred_fallthru
          _
      $region12: #{tpu_custom_call.1} parent=5 // pred_fallthru
        _
      %p171 = scmp.lt.s32.totalorder %s21, 2
      // Predicated region
      $region21: #{tpu_custom_call.1} parent=5 // pred_check
        %p172 = pneg %p171
      $region22: #{tpu_custom_call.1} parent=5 // pred_check_branch
        %174 = sbr.rel (%p172) target = $region24
      $region23: #{tpu_custom_call.1} parent=5 // pred_region
        // Predicated region
        $region25: #{tpu_custom_call.1} parent=23 // pred_check
          %p175 = pneg %p102
        $region26: #{tpu_custom_call.1} parent=23 // pred_check_branch
          %177 = sbr.rel (%p175) target = $region28
        $region27: #{tpu_custom_call.1} parent=23 // pred_region
          %p178 = scmp.lt.s32.totalorder %s29, 1
          %s179 = scalar_select %p178, %s29, 1
          %p180 = scmp.lt.s32.totalorder %s28, 0
          %s181 = scalar_select %p180, %s28, 0
          %s182 = sadd.s32 %s181, %s179
          %s183 = smul.addr %s182, 8
          %s184 = scalar_lea.vmem %s4, %s183
        $region28: #{tpu_custom_call.1} parent=23 // pred_fallthru
          _
      $region24: #{tpu_custom_call.1} parent=5 // pred_fallthru
        _
      %p185 = scmp.le.s32.totalorder 1, %s21
      %p186 = scmp.lt.s32.totalorder %s21, 3
      %p187 = pnand %p185, %p186
      %p188 = pneg %p187
      // Predicated region
      $region29: #{tpu_custom_call.1} parent=5 // pred_check
        _
      $region30: #{tpu_custom_call.1} parent=5 // pred_check_branch
        %190 = sbr.rel (%p187) target = $region32
      $region31: #{tpu_custom_call.1} parent=5 // pred_region
        %s191 = ssub.s32 %s21, 1
        // Predicated region
        $region33: #{tpu_custom_call.1} parent=31 // pred_check
          %p192 = pneg %p54
        $region34: #{tpu_custom_call.1} parent=31 // pred_check_branch
          %194 = sbr.rel (%p192) target = $region36
        $region35: #{tpu_custom_call.1} parent=31 // pred_region
          %195 = dma.done [#allocation8], 2048
        $region36: #{tpu_custom_call.1} parent=31 // pred_fallthru
          _
        %p196 = pneg %p54
        %p197 = pneg %p51
        %p198 = scmp.lt.s32.totalorder %s30, 0
        %s199 = scalar_select %p198, %s30, 0
        %s200 = smul.addr %s199, 8
        %s201 = scalar_lea.vmem %s3, %s200
        %p202 = pneg %p80
        %p203 = pneg %p77
        %p204 = scmp.lt.s32.totalorder %s31, 1
        %s205 = scalar_select %p204, %s31, 1
        %p206 = scmp.lt.s32.totalorder %s30, 0
        %s207 = scalar_select %p206, %s30, 0
        %s208 = sadd.s32 %s207, %s205
        %s209 = smul.addr %s208, 8
        %s210 = scalar_lea.vmem %s4, %s209
        %p211 = pneg %p108
        %p212 = pneg %p105
        %p213 = pneg %p136
        %p214 = pneg %p133
        %s215 = sand.u32 %s123, 1
        %s216 = scalar_lea.sflag [#allocation9], %s215
        %s217 = sand.u32 %s123, 1
        %s218 = smul.addr %s217, 8
        %s219 = scalar_lea.vmem [#allocation10], %s218
        %p220 = scmp.lt.s32.totalorder %s30, 0
        %s221 = scalar_select %p220, %s30, 0
        %s222 = smul.addr %s221, 8
        %s223 = scalar_lea.vmem %s3, %s222
        %p224 = scmp.lt.s32.totalorder %s31, 1
        %s225 = scalar_select %p224, %s31, 1
        %p226 = scmp.lt.s32.totalorder %s30, 0
        %s227 = scalar_select %p226, %s30, 0
        %s228 = sadd.s32 %s227, %s225
        %s229 = smul.addr %s228, 8
        %s230 = scalar_lea.vmem %s4, %s229
        %s231 = smul.u32 %s31, 8
        %s232 = smul.u32 %s30, 8
        %s233 = sadd.s32 %s231, %s232
        %s234 = sld [smem:[#allocation6 + %s233]]
        %s235 = scalar_lea.vmem %s1, %s234
        %p237 = scmp.lt.u32.totalorder 1, 8
        %p238 = pneg %p237
        // Predicated region
        $region37: #{tpu_custom_call.1} parent=31 // pred_check
          _
        $region38: #{tpu_custom_call.1} parent=31 // pred_check_branch
          %240 = sbr.rel (%p237) target = $region40
        $region39: #{tpu_custom_call.1} parent=31 // pred_region
          %s255 = sand.u32 1, 7
          %p256 = scmp.eq.s32.totalorder %s255, 0
          %p257 = pneg %p256
          // Predicated region
          $region52: #{tpu_custom_call.1} parent=39 // pred_check
            _
          $region53: #{tpu_custom_call.1} parent=39 // pred_check_branch
            %259 = sbr.rel (%p256) target = $region55
          $region54: #{tpu_custom_call.1} parent=39 // pred_region
            %s260 = sand.u32 1, 7
            %s261 = ssub.s32 1, %s260
            %s262 = scalar_lea.vmem %s235, %s261
            %s263 = ssub.s32 1, %s260
            %s264 = scalar_lea.vmem [#allocation2], %s263
            %s265 = sshllo.u32 0, %s260
            loop: start=0, step=1, limit=1
            $region56: #{tpu_custom_call.1} parent=54 // loop_pre_header
              _
            $region57: #{tpu_custom_call.1} parent=54 // loop_header
              %s267 = sphi 0, %s271
              %p268 = scmp.ge.s32.totalorder %s267, 1
              %s272 = sphi %s262, %s262
              %s273 = sphi %s264, %s264
            $region58: #{tpu_custom_call.1} parent=54 // loop_header_branch
              %270 = sbr.rel (%p268) target = $region62
            $region59: #{tpu_custom_call.1} parent=54 // loop_body
              %v274 = vld [vmem:[%s272] sm:%s265]
              %275 = vst [vmem:[%s273] sm:%s265] %v274
            $region60: #{tpu_custom_call.1} parent=54 // loop_footer
              %s271 = sadd.s32 1, %s267
            $region61: #{tpu_custom_call.1} parent=54 // loop_footer_branch
              %266 = sbr.rel target = $region57
            $region62: #{tpu_custom_call.1} parent=54 // loop_exit
              _
          $region55: #{tpu_custom_call.1} parent=39 // pred_fallthru
            _
        $region40: #{tpu_custom_call.1} parent=31 // pred_fallthru
          _
        // Predicated region
        $region41: #{tpu_custom_call.1} parent=31 // pred_check
          %p241 = pneg %p237
        $region42: #{tpu_custom_call.1} parent=31 // pred_check_branch
          %243 = sbr.rel (%p241) target = $region44
        $region43: #{tpu_custom_call.1} parent=31 // pred_region
          %s244 = sshllo.u32 0, 1
          loop: start=0, step=1, limit=1
          $region45: #{tpu_custom_call.1} parent=43 // loop_pre_header
            _
          $region46: #{tpu_custom_call.1} parent=43 // loop_header
            %s246 = sphi 0, %s250
            %p247 = scmp.ge.s32.totalorder %s246, 1
            %s251 = sphi %s235, %s235
            %s252 = sphi [#allocation2], [#allocation2]
          $region47: #{tpu_custom_call.1} parent=43 // loop_header_branch
            %249 = sbr.rel (%p247) target = $region51
          $region48: #{tpu_custom_call.1} parent=43 // loop_body
            %v253 = vld [vmem:[%s251] sm:%s244]
            %254 = vst [vmem:[%s252] sm:%s244] %v253
          $region49: #{tpu_custom_call.1} parent=43 // loop_footer
            %s250 = sadd.s32 1, %s246
          $region50: #{tpu_custom_call.1} parent=43 // loop_footer_branch
            %245 = sbr.rel target = $region46
          $region51: #{tpu_custom_call.1} parent=43 // loop_exit
            _
        $region44: #{tpu_custom_call.1} parent=31 // pred_fallthru
          _
        // Predicated region
        $region63: #{tpu_custom_call.1} parent=31 // pred_check
          _
        $region64: #{tpu_custom_call.1} parent=31 // pred_check_branch
          %278 = sbr.rel (0) target = $region66
        $region65: #{tpu_custom_call.1} parent=31 // pred_region
          %279 = vsyncadd [#allocation4], 16
        $region66: #{tpu_custom_call.1} parent=31 // pred_fallthru
          _
        %s280 = sadd.s32 %s233, 1
        %s281 = sld [smem:[#allocation6 + %s280]]
        %s282 = scalar_lea.vmem %s1, %s281
        %s283 = scalar_lea.vmem [#allocation2], 1
        %p285 = scmp.lt.u32.totalorder 1, 8
        %p286 = pneg %p285
        // Predicated region
        $region67: #{tpu_custom_call.1} parent=31 // pred_check
          _
        $region68: #{tpu_custom_call.1} parent=31 // pred_check_branch
          %288 = sbr.rel (%p285) target = $region70
        $region69: #{tpu_custom_call.1} parent=31 // pred_region
          %s303 = sand.u32 1, 7
          %p304 = scmp.eq.s32.totalorder %s303, 0
          %p305 = pneg %p304
          // Predicated region
          $region82: #{tpu_custom_call.1} parent=69 // pred_check
            _
          $region83: #{tpu_custom_call.1} parent=69 // pred_check_branch
            %307 = sbr.rel (%p304) target = $region85
          $region84: #{tpu_custom_call.1} parent=69 // pred_region
            %s308 = sand.u32 1, 7
            %s309 = ssub.s32 1, %s308
            %s310 = scalar_lea.vmem %s282, %s309
            %s311 = ssub.s32 1, %s308
            %s312 = scalar_lea.vmem %s283, %s311 [#allocation2]
            %s313 = sshllo.u32 0, %s308
            loop: start=0, step=1, limit=1
            $region86: #{tpu_custom_call.1} parent=84 // loop_pre_header
              _
            $region87: #{tpu_custom_call.1} parent=84 // loop_header
              %s315 = sphi 0, %s319
              %p316 = scmp.ge.s32.totalorder %s315, 1
              %s320 = sphi %s310, %s310
              %s321 = sphi %s312, %s312
            $region88: #{tpu_custom_call.1} parent=84 // loop_header_branch
              %318 = sbr.rel (%p316) target = $region92
            $region89: #{tpu_custom_call.1} parent=84 // loop_body
              %v322 = vld [vmem:[%s320] sm:%s313]
              %323 = vst [vmem:[%s321] sm:%s313] %v322
            $region90: #{tpu_custom_call.1} parent=84 // loop_footer
              %s319 = sadd.s32 1, %s315
            $region91: #{tpu_custom_call.1} parent=84 // loop_footer_branch
              %314 = sbr.rel target = $region87
            $region92: #{tpu_custom_call.1} parent=84 // loop_exit
              _
          $region85: #{tpu_custom_call.1} parent=69 // pred_fallthru
            _
        $region70: #{tpu_custom_call.1} parent=31 // pred_fallthru
          _
        // Predicated region
        $region71: #{tpu_custom_call.1} parent=31 // pred_check
          %p289 = pneg %p285
        $region72: #{tpu_custom_call.1} parent=31 // pred_check_branch
          %291 = sbr.rel (%p289) target = $region74
        $region73: #{tpu_custom_call.1} parent=31 // pred_region
          %s292 = sshllo.u32 0, 1
          loop: start=0, step=1, limit=1
          $region75: #{tpu_custom_call.1} parent=73 // loop_pre_header
            _
          $region76: #{tpu_custom_call.1} parent=73 // loop_header
            %s294 = sphi 0, %s298
            %p295 = scmp.ge.s32.totalorder %s294, 1
            %s299 = sphi %s282, %s282
            %s300 = sphi %s283, %s283
          $region77: #{tpu_custom_call.1} parent=73 // loop_header_branch
            %297 = sbr.rel (%p295) target = $region81
          $region78: #{tpu_custom_call.1} parent=73 // loop_body
            %v301 = vld [vmem:[%s299] sm:%s292]
            %302 = vst [vmem:[%s300] sm:%s292] %v301
          $region79: #{tpu_custom_call.1} parent=73 // loop_footer
            %s298 = sadd.s32 1, %s294
          $region80: #{tpu_custom_call.1} parent=73 // loop_footer_branch
            %293 = sbr.rel target = $region76
          $region81: #{tpu_custom_call.1} parent=73 // loop_exit
            _
        $region74: #{tpu_custom_call.1} parent=31 // pred_fallthru
          _
        // Predicated region
        $region93: #{tpu_custom_call.1} parent=31 // pred_check
          _
        $region94: #{tpu_custom_call.1} parent=31 // pred_check_branch
          %326 = sbr.rel (0) target = $region96
        $region95: #{tpu_custom_call.1} parent=31 // pred_region
          %327 = vsyncadd [#allocation4], 16
        $region96: #{tpu_custom_call.1} parent=31 // pred_fallthru
          _
        %s328 = sadd.s32 %s233, 2
        %s329 = sld [smem:[#allocation6 + %s328]]
        %s330 = scalar_lea.vmem %s1, %s329
        %s331 = scalar_lea.vmem [#allocation2], 2
        %p333 = scmp.lt.u32.totalorder 1, 8
        %p334 = pneg %p333
        // Predicated region
        $region97: #{tpu_custom_call.1} parent=31 // pred_check
          _
        $region98: #{tpu_custom_call.1} parent=31 // pred_check_branch
          %336 = sbr.rel (%p333) target = $region100
        $region99: #{tpu_custom_call.1} parent=31 // pred_region
          %s351 = sand.u32 1, 7
          %p352 = scmp.eq.s32.totalorder %s351, 0
          %p353 = pneg %p352
          // Predicated region
          $region112: #{tpu_custom_call.1} parent=99 // pred_check
            _
          $region113: #{tpu_custom_call.1} parent=99 // pred_check_branch
            %355 = sbr.rel (%p352) target = $region115
          $region114: #{tpu_custom_call.1} parent=99 // pred_region
            %s356 = sand.u32 1, 7
            %s357 = ssub.s32 1, %s356
            %s358 = scalar_lea.vmem %s330, %s357
            %s359 = ssub.s32 1, %s356
            %s360 = scalar_lea.vmem %s331, %s359 [#allocation2]
            %s361 = sshllo.u32 0, %s356
            loop: start=0, step=1, limit=1
            $region116: #{tpu_custom_call.1} parent=114 // loop_pre_header
              _
            $region117: #{tpu_custom_call.1} parent=114 // loop_header
              %s363 = sphi 0, %s367
              %p364 = scmp.ge.s32.totalorder %s363, 1
              %s368 = sphi %s358, %s358
              %s369 = sphi %s360, %s360
            $region118: #{tpu_custom_call.1} parent=114 // loop_header_branch
              %366 = sbr.rel (%p364) target = $region122
            $region119: #{tpu_custom_call.1} parent=114 // loop_body
              %v370 = vld [vmem:[%s368] sm:%s361]
              %371 = vst [vmem:[%s369] sm:%s361] %v370
            $region120: #{tpu_custom_call.1} parent=114 // loop_footer
              %s367 = sadd.s32 1, %s363
            $region121: #{tpu_custom_call.1} parent=114 // loop_footer_branch
              %362 = sbr.rel target = $region117
            $region122: #{tpu_custom_call.1} parent=114 // loop_exit
              _
          $region115: #{tpu_custom_call.1} parent=99 // pred_fallthru
            _
        $region100: #{tpu_custom_call.1} parent=31 // pred_fallthru
          _
        // Predicated region
        $region101: #{tpu_custom_call.1} parent=31 // pred_check
          %p337 = pneg %p333
        $region102: #{tpu_custom_call.1} parent=31 // pred_check_branch
          %339 = sbr.rel (%p337) target = $region104
        $region103: #{tpu_custom_call.1} parent=31 // pred_region
          %s340 = sshllo.u32 0, 1
          loop: start=0, step=1, limit=1
          $region105: #{tpu_custom_call.1} parent=103 // loop_pre_header
            _
          $region106: #{tpu_custom_call.1} parent=103 // loop_header
            %s342 = sphi 0, %s346
            %p343 = scmp.ge.s32.totalorder %s342, 1
            %s347 = sphi %s330, %s330
            %s348 = sphi %s331, %s331
          $region107: #{tpu_custom_call.1} parent=103 // loop_header_branch
            %345 = sbr.rel (%p343) target = $region111
          $region108: #{tpu_custom_call.1} parent=103 // loop_body
            %v349 = vld [vmem:[%s347] sm:%s340]
            %350 = vst [vmem:[%s348] sm:%s340] %v349
          $region109: #{tpu_custom_call.1} parent=103 // loop_footer
            %s346 = sadd.s32 1, %s342
          $region110: #{tpu_custom_call.1} parent=103 // loop_footer_branch
            %341 = sbr.rel target = $region106
          $region111: #{tpu_custom_call.1} parent=103 // loop_exit
            _
        $region104: #{tpu_custom_call.1} parent=31 // pred_fallthru
          _
        // Predicated region
        $region123: #{tpu_custom_call.1} parent=31 // pred_check
          _
        $region124: #{tpu_custom_call.1} parent=31 // pred_check_branch
          %374 = sbr.rel (0) target = $region126
        $region125: #{tpu_custom_call.1} parent=31 // pred_region
          %375 = vsyncadd [#allocation4], 16
        $region126: #{tpu_custom_call.1} parent=31 // pred_fallthru
          _
        %s376 = sadd.s32 %s233, 3
        %s377 = sld [smem:[#allocation6 + %s376]]
        %s378 = scalar_lea.vmem %s1, %s377
        %s379 = scalar_lea.vmem [#allocation2], 3
        %p381 = scmp.lt.u32.totalorder 1, 8
        %p382 = pneg %p381
        // Predicated region
        $region127: #{tpu_custom_call.1} parent=31 // pred_check
          _
        $region128: #{tpu_custom_call.1} parent=31 // pred_check_branch
          %384 = sbr.rel (%p381) target = $region130
        $region129: #{tpu_custom_call.1} parent=31 // pred_region
          %s399 = sand.u32 1, 7
          %p400 = scmp.eq.s32.totalorder %s399, 0
          %p401 = pneg %p400
          // Predicated region
          $region142: #{tpu_custom_call.1} parent=129 // pred_check
            _
          $region143: #{tpu_custom_call.1} parent=129 // pred_check_branch
            %403 = sbr.rel (%p400) target = $region145
          $region144: #{tpu_custom_call.1} parent=129 // pred_region
            %s404 = sand.u32 1, 7
            %s405 = ssub.s32 1, %s404
            %s406 = scalar_lea.vmem %s378, %s405
            %s407 = ssub.s32 1, %s404
            %s408 = scalar_lea.vmem %s379, %s407 [#allocation2]
            %s409 = sshllo.u32 0, %s404
            loop: start=0, step=1, limit=1
            $region146: #{tpu_custom_call.1} parent=144 // loop_pre_header
              _
            $region147: #{tpu_custom_call.1} parent=144 // loop_header
              %s411 = sphi 0, %s415
              %p412 = scmp.ge.s32.totalorder %s411, 1
              %s416 = sphi %s406, %s406
              %s417 = sphi %s408, %s408
            $region148: #{tpu_custom_call.1} parent=144 // loop_header_branch
              %414 = sbr.rel (%p412) target = $region152
            $region149: #{tpu_custom_call.1} parent=144 // loop_body
              %v418 = vld [vmem:[%s416] sm:%s409]
              %419 = vst [vmem:[%s417] sm:%s409] %v418
            $region150: #{tpu_custom_call.1} parent=144 // loop_footer
              %s415 = sadd.s32 1, %s411
            $region151: #{tpu_custom_call.1} parent=144 // loop_footer_branch
              %410 = sbr.rel target = $region147
            $region152: #{tpu_custom_call.1} parent=144 // loop_exit
              _
          $region145: #{tpu_custom_call.1} parent=129 // pred_fallthru
            _
        $region130: #{tpu_custom_call.1} parent=31 // pred_fallthru
          _
        // Predicated region
        $region131: #{tpu_custom_call.1} parent=31 // pred_check
          %p385 = pneg %p381
        $region132: #{tpu_custom_call.1} parent=31 // pred_check_branch
          %387 = sbr.rel (%p385) target = $region134
        $region133: #{tpu_custom_call.1} parent=31 // pred_region
          %s388 = sshllo.u32 0, 1
          loop: start=0, step=1, limit=1
          $region135: #{tpu_custom_call.1} parent=133 // loop_pre_header
            _
          $region136: #{tpu_custom_call.1} parent=133 // loop_header
            %s390 = sphi 0, %s394
            %p391 = scmp.ge.s32.totalorder %s390, 1
            %s395 = sphi %s378, %s378
            %s396 = sphi %s379, %s379
          $region137: #{tpu_custom_call.1} parent=133 // loop_header_branch
            %393 = sbr.rel (%p391) target = $region141
          $region138: #{tpu_custom_call.1} parent=133 // loop_body
            %v397 = vld [vmem:[%s395] sm:%s388]
            %398 = vst [vmem:[%s396] sm:%s388] %v397
          $region139: #{tpu_custom_call.1} parent=133 // loop_footer
            %s394 = sadd.s32 1, %s390
          $region140: #{tpu_custom_call.1} parent=133 // loop_footer_branch
            %389 = sbr.rel target = $region136
          $region141: #{tpu_custom_call.1} parent=133 // loop_exit
            _
        $region134: #{tpu_custom_call.1} parent=31 // pred_fallthru
          _
        // Predicated region
        $region153: #{tpu_custom_call.1} parent=31 // pred_check
          _
        $region154: #{tpu_custom_call.1} parent=31 // pred_check_branch
          %422 = sbr.rel (0) target = $region156
        $region155: #{tpu_custom_call.1} parent=31 // pred_region
          %423 = vsyncadd [#allocation4], 16
        $region156: #{tpu_custom_call.1} parent=31 // pred_fallthru
          _
        %s424 = sadd.s32 %s233, 4
        %s425 = sld [smem:[#allocation6 + %s424]]
        %s426 = scalar_lea.vmem %s1, %s425
        %s427 = scalar_lea.vmem [#allocation2], 4
        %p429 = scmp.lt.u32.totalorder 1, 8
        %p430 = pneg %p429
        // Predicated region
        $region157: #{tpu_custom_call.1} parent=31 // pred_check
          _
        $region158: #{tpu_custom_call.1} parent=31 // pred_check_branch
          %432 = sbr.rel (%p429) target = $region160
        $region159: #{tpu_custom_call.1} parent=31 // pred_region
          %s447 = sand.u32 1, 7
          %p448 = scmp.eq.s32.totalorder %s447, 0
          %p449 = pneg %p448
          // Predicated region
          $region172: #{tpu_custom_call.1} parent=159 // pred_check
            _
          $region173: #{tpu_custom_call.1} parent=159 // pred_check_branch
            %451 = sbr.rel (%p448) target = $region175
          $region174: #{tpu_custom_call.1} parent=159 // pred_region
            %s452 = sand.u32 1, 7
            %s453 = ssub.s32 1, %s452
            %s454 = scalar_lea.vmem %s426, %s453
            %s455 = ssub.s32 1, %s452
            %s456 = scalar_lea.vmem %s427, %s455 [#allocation2]
            %s457 = sshllo.u32 0, %s452
            loop: start=0, step=1, limit=1
            $region176: #{tpu_custom_call.1} parent=174 // loop_pre_header
              _
            $region177: #{tpu_custom_call.1} parent=174 // loop_header
              %s459 = sphi 0, %s463
              %p460 = scmp.ge.s32.totalorder %s459, 1
              %s464 = sphi %s454, %s454
              %s465 = sphi %s456, %s456
            $region178: #{tpu_custom_call.1} parent=174 // loop_header_branch
              %462 = sbr.rel (%p460) target = $region182
            $region179: #{tpu_custom_call.1} parent=174 // loop_body
              %v466 = vld [vmem:[%s464] sm:%s457]
              %467 = vst [vmem:[%s465] sm:%s457] %v466
            $region180: #{tpu_custom_call.1} parent=174 // loop_footer
              %s463 = sadd.s32 1, %s459
            $region181: #{tpu_custom_call.1} parent=174 // loop_footer_branch
              %458 = sbr.rel target = $region177
            $region182: #{tpu_custom_call.1} parent=174 // loop_exit
              _
          $region175: #{tpu_custom_call.1} parent=159 // pred_fallthru
            _
        $region160: #{tpu_custom_call.1} parent=31 // pred_fallthru
          _
        // Predicated region
        $region161: #{tpu_custom_call.1} parent=31 // pred_check
          %p433 = pneg %p429
        $region162: #{tpu_custom_call.1} parent=31 // pred_check_branch
          %435 = sbr.rel (%p433) target = $region164
        $region163: #{tpu_custom_call.1} parent=31 // pred_region
          %s436 = sshllo.u32 0, 1
          loop: start=0, step=1, limit=1
          $region165: #{tpu_custom_call.1} parent=163 // loop_pre_header
            _
          $region166: #{tpu_custom_call.1} parent=163 // loop_header
            %s438 = sphi 0, %s442
            %p439 = scmp.ge.s32.totalorder %s438, 1
            %s443 = sphi %s426, %s426
            %s444 = sphi %s427, %s427
          $region167: #{tpu_custom_call.1} parent=163 // loop_header_branch
            %441 = sbr.rel (%p439) target = $region171
          $region168: #{tpu_custom_call.1} parent=163 // loop_body
            %v445 = vld [vmem:[%s443] sm:%s436]
            %446 = vst [vmem:[%s444] sm:%s436] %v445
          $region169: #{tpu_custom_call.1} parent=163 // loop_footer
            %s442 = sadd.s32 1, %s438
          $region170: #{tpu_custom_call.1} parent=163 // loop_footer_branch
            %437 = sbr.rel target = $region166
          $region171: #{tpu_custom_call.1} parent=163 // loop_exit
            _
        $region164: #{tpu_custom_call.1} parent=31 // pred_fallthru
          _
        // Predicated region
        $region183: #{tpu_custom_call.1} parent=31 // pred_check
          _
        $region184: #{tpu_custom_call.1} parent=31 // pred_check_branch
          %470 = sbr.rel (0) target = $region186
        $region185: #{tpu_custom_call.1} parent=31 // pred_region
          %471 = vsyncadd [#allocation4], 16
        $region186: #{tpu_custom_call.1} parent=31 // pred_fallthru
          _
        %s472 = sadd.s32 %s233, 5
        %s473 = sld [smem:[#allocation6 + %s472]]
        %s474 = scalar_lea.vmem %s1, %s473
        %s475 = scalar_lea.vmem [#allocation2], 5
        %p477 = scmp.lt.u32.totalorder 1, 8
        %p478 = pneg %p477
        // Predicated region
        $region187: #{tpu_custom_call.1} parent=31 // pred_check
          _
        $region188: #{tpu_custom_call.1} parent=31 // pred_check_branch
          %480 = sbr.rel (%p477) target = $region190
        $region189: #{tpu_custom_call.1} parent=31 // pred_region
          %s495 = sand.u32 1, 7
          %p496 = scmp.eq.s32.totalorder %s495, 0
          %p497 = pneg %p496
          // Predicated region
          $region202: #{tpu_custom_call.1} parent=189 // pred_check
            _
          $region203: #{tpu_custom_call.1} parent=189 // pred_check_branch
            %499 = sbr.rel (%p496) target = $region205
          $region204: #{tpu_custom_call.1} parent=189 // pred_region
            %s500 = sand.u32 1, 7
            %s501 = ssub.s32 1, %s500
            %s502 = scalar_lea.vmem %s474, %s501
            %s503 = ssub.s32 1, %s500
            %s504 = scalar_lea.vmem %s475, %s503 [#allocation2]
            %s505 = sshllo.u32 0, %s500
            loop: start=0, step=1, limit=1
            $region206: #{tpu_custom_call.1} parent=204 // loop_pre_header
              _
            $region207: #{tpu_custom_call.1} parent=204 // loop_header
              %s507 = sphi 0, %s511
              %p508 = scmp.ge.s32.totalorder %s507, 1
              %s512 = sphi %s502, %s502
              %s513 = sphi %s504, %s504
            $region208: #{tpu_custom_call.1} parent=204 // loop_header_branch
              %510 = sbr.rel (%p508) target = $region212
            $region209: #{tpu_custom_call.1} parent=204 // loop_body
              %v514 = vld [vmem:[%s512] sm:%s505]
              %515 = vst [vmem:[%s513] sm:%s505] %v514
            $region210: #{tpu_custom_call.1} parent=204 // loop_footer
              %s511 = sadd.s32 1, %s507
            $region211: #{tpu_custom_call.1} parent=204 // loop_footer_branch
              %506 = sbr.rel target = $region207
            $region212: #{tpu_custom_call.1} parent=204 // loop_exit
              _
          $region205: #{tpu_custom_call.1} parent=189 // pred_fallthru
            _
        $region190: #{tpu_custom_call.1} parent=31 // pred_fallthru
          _
        // Predicated region
        $region191: #{tpu_custom_call.1} parent=31 // pred_check
          %p481 = pneg %p477
        $region192: #{tpu_custom_call.1} parent=31 // pred_check_branch
          %483 = sbr.rel (%p481) target = $region194
        $region193: #{tpu_custom_call.1} parent=31 // pred_region
          %s484 = sshllo.u32 0, 1
          loop: start=0, step=1, limit=1
          $region195: #{tpu_custom_call.1} parent=193 // loop_pre_header
            _
          $region196: #{tpu_custom_call.1} parent=193 // loop_header
            %s486 = sphi 0, %s490
            %p487 = scmp.ge.s32.totalorder %s486, 1
            %s491 = sphi %s474, %s474
            %s492 = sphi %s475, %s475
          $region197: #{tpu_custom_call.1} parent=193 // loop_header_branch
            %489 = sbr.rel (%p487) target = $region201
          $region198: #{tpu_custom_call.1} parent=193 // loop_body
            %v493 = vld [vmem:[%s491] sm:%s484]
            %494 = vst [vmem:[%s492] sm:%s484] %v493
          $region199: #{tpu_custom_call.1} parent=193 // loop_footer
            %s490 = sadd.s32 1, %s486
          $region200: #{tpu_custom_call.1} parent=193 // loop_footer_branch
            %485 = sbr.rel target = $region196
          $region201: #{tpu_custom_call.1} parent=193 // loop_exit
            _
        $region194: #{tpu_custom_call.1} parent=31 // pred_fallthru
          _
        // Predicated region
        $region213: #{tpu_custom_call.1} parent=31 // pred_check
          _
        $region214: #{tpu_custom_call.1} parent=31 // pred_check_branch
          %518 = sbr.rel (0) target = $region216
        $region215: #{tpu_custom_call.1} parent=31 // pred_region
          %519 = vsyncadd [#allocation4], 16
        $region216: #{tpu_custom_call.1} parent=31 // pred_fallthru
          _
        %s520 = sadd.s32 %s233, 6
        %s521 = sld [smem:[#allocation6 + %s520]]
        %s522 = scalar_lea.vmem %s1, %s521
        %s523 = scalar_lea.vmem [#allocation2], 6
        %p525 = scmp.lt.u32.totalorder 1, 8
        %p526 = pneg %p525
        // Predicated region
        $region217: #{tpu_custom_call.1} parent=31 // pred_check
          _
        $region218: #{tpu_custom_call.1} parent=31 // pred_check_branch
          %528 = sbr.rel (%p525) target = $region220
        $region219: #{tpu_custom_call.1} parent=31 // pred_region
          %s543 = sand.u32 1, 7
          %p544 = scmp.eq.s32.totalorder %s543, 0
          %p545 = pneg %p544
          // Predicated region
          $region232: #{tpu_custom_call.1} parent=219 // pred_check
            _
          $region233: #{tpu_custom_call.1} parent=219 // pred_check_branch
            %547 = sbr.rel (%p544) target = $region235
          $region234: #{tpu_custom_call.1} parent=219 // pred_region
            %s548 = sand.u32 1, 7
            %s549 = ssub.s32 1, %s548
            %s550 = scalar_lea.vmem %s522, %s549
            %s551 = ssub.s32 1, %s548
            %s552 = scalar_lea.vmem %s523, %s551 [#allocation2]
            %s553 = sshllo.u32 0, %s548
            loop: start=0, step=1, limit=1
            $region236: #{tpu_custom_call.1} parent=234 // loop_pre_header
              _
            $region237: #{tpu_custom_call.1} parent=234 // loop_header
              %s555 = sphi 0, %s559
              %p556 = scmp.ge.s32.totalorder %s555, 1
              %s560 = sphi %s550, %s550
              %s561 = sphi %s552, %s552
            $region238: #{tpu_custom_call.1} parent=234 // loop_header_branch
              %558 = sbr.rel (%p556) target = $region242
            $region239: #{tpu_custom_call.1} parent=234 // loop_body
              %v562 = vld [vmem:[%s560] sm:%s553]
              %563 = vst [vmem:[%s561] sm:%s553] %v562
            $region240: #{tpu_custom_call.1} parent=234 // loop_footer
              %s559 = sadd.s32 1, %s555
            $region241: #{tpu_custom_call.1} parent=234 // loop_footer_branch
              %554 = sbr.rel target = $region237
            $region242: #{tpu_custom_call.1} parent=234 // loop_exit
              _
          $region235: #{tpu_custom_call.1} parent=219 // pred_fallthru
            _
        $region220: #{tpu_custom_call.1} parent=31 // pred_fallthru
          _
        // Predicated region
        $region221: #{tpu_custom_call.1} parent=31 // pred_check
          %p529 = pneg %p525
        $region222: #{tpu_custom_call.1} parent=31 // pred_check_branch
          %531 = sbr.rel (%p529) target = $region224
        $region223: #{tpu_custom_call.1} parent=31 // pred_region
          %s532 = sshllo.u32 0, 1
          loop: start=0, step=1, limit=1
          $region225: #{tpu_custom_call.1} parent=223 // loop_pre_header
            _
          $region226: #{tpu_custom_call.1} parent=223 // loop_header
            %s534 = sphi 0, %s538
            %p535 = scmp.ge.s32.totalorder %s534, 1
            %s539 = sphi %s522, %s522
            %s540 = sphi %s523, %s523
          $region227: #{tpu_custom_call.1} parent=223 // loop_header_branch
            %537 = sbr.rel (%p535) target = $region231
          $region228: #{tpu_custom_call.1} parent=223 // loop_body
            %v541 = vld [vmem:[%s539] sm:%s532]
            %542 = vst [vmem:[%s540] sm:%s532] %v541
          $region229: #{tpu_custom_call.1} parent=223 // loop_footer
            %s538 = sadd.s32 1, %s534
          $region230: #{tpu_custom_call.1} parent=223 // loop_footer_branch
            %533 = sbr.rel target = $region226
          $region231: #{tpu_custom_call.1} parent=223 // loop_exit
            _
        $region224: #{tpu_custom_call.1} parent=31 // pred_fallthru
          _
        // Predicated region
        $region243: #{tpu_custom_call.1} parent=31 // pred_check
          _
        $region244: #{tpu_custom_call.1} parent=31 // pred_check_branch
          %566 = sbr.rel (0) target = $region246
        $region245: #{tpu_custom_call.1} parent=31 // pred_region
          %567 = vsyncadd [#allocation4], 16
        $region246: #{tpu_custom_call.1} parent=31 // pred_fallthru
          _
        %s568 = sadd.s32 %s233, 7
        %s569 = sld [smem:[#allocation6 + %s568]]
        %s570 = scalar_lea.vmem %s1, %s569
        %s571 = scalar_lea.vmem [#allocation2], 7
        %p573 = scmp.lt.u32.totalorder 1, 8
        %p574 = pneg %p573
        // Predicated region
        $region247: #{tpu_custom_call.1} parent=31 // pred_check
          _
        $region248: #{tpu_custom_call.1} parent=31 // pred_check_branch
          %576 = sbr.rel (%p573) target = $region250
        $region249: #{tpu_custom_call.1} parent=31 // pred_region
          %s591 = sand.u32 1, 7
          %p592 = scmp.eq.s32.totalorder %s591, 0
          %p593 = pneg %p592
          // Predicated region
          $region262: #{tpu_custom_call.1} parent=249 // pred_check
            _
          $region263: #{tpu_custom_call.1} parent=249 // pred_check_branch
            %595 = sbr.rel (%p592) target = $region265
          $region264: #{tpu_custom_call.1} parent=249 // pred_region
            %s596 = sand.u32 1, 7
            %s597 = ssub.s32 1, %s596
            %s598 = scalar_lea.vmem %s570, %s597
            %s599 = ssub.s32 1, %s596
            %s600 = scalar_lea.vmem %s571, %s599 [#allocation2]
            %s601 = sshllo.u32 0, %s596
            loop: start=0, step=1, limit=1
            $region266: #{tpu_custom_call.1} parent=264 // loop_pre_header
              _
            $region267: #{tpu_custom_call.1} parent=264 // loop_header
              %s603 = sphi 0, %s607
              %p604 = scmp.ge.s32.totalorder %s603, 1
              %s608 = sphi %s598, %s598
              %s609 = sphi %s600, %s600
            $region268: #{tpu_custom_call.1} parent=264 // loop_header_branch
              %606 = sbr.rel (%p604) target = $region272
            $region269: #{tpu_custom_call.1} parent=264 // loop_body
              %v610 = vld [vmem:[%s608] sm:%s601]
              %611 = vst [vmem:[%s609] sm:%s601] %v610
            $region270: #{tpu_custom_call.1} parent=264 // loop_footer
              %s607 = sadd.s32 1, %s603
            $region271: #{tpu_custom_call.1} parent=264 // loop_footer_branch
              %602 = sbr.rel target = $region267
            $region272: #{tpu_custom_call.1} parent=264 // loop_exit
              _
          $region265: #{tpu_custom_call.1} parent=249 // pred_fallthru
            _
        $region250: #{tpu_custom_call.1} parent=31 // pred_fallthru
          _
        // Predicated region
        $region251: #{tpu_custom_call.1} parent=31 // pred_check
          %p577 = pneg %p573
        $region252: #{tpu_custom_call.1} parent=31 // pred_check_branch
          %579 = sbr.rel (%p577) target = $region254
        $region253: #{tpu_custom_call.1} parent=31 // pred_region
          %s580 = sshllo.u32 0, 1
          loop: start=0, step=1, limit=1
          $region255: #{tpu_custom_call.1} parent=253 // loop_pre_header
            _
          $region256: #{tpu_custom_call.1} parent=253 // loop_header
            %s582 = sphi 0, %s586
            %p583 = scmp.ge.s32.totalorder %s582, 1
            %s587 = sphi %s570, %s570
            %s588 = sphi %s571, %s571
          $region257: #{tpu_custom_call.1} parent=253 // loop_header_branch
            %585 = sbr.rel (%p583) target = $region261
          $region258: #{tpu_custom_call.1} parent=253 // loop_body
            %v589 = vld [vmem:[%s587] sm:%s580]
            %590 = vst [vmem:[%s588] sm:%s580] %v589
          $region259: #{tpu_custom_call.1} parent=253 // loop_footer
            %s586 = sadd.s32 1, %s582
          $region260: #{tpu_custom_call.1} parent=253 // loop_footer_branch
            %581 = sbr.rel target = $region256
          $region261: #{tpu_custom_call.1} parent=253 // loop_exit
            _
        $region254: #{tpu_custom_call.1} parent=31 // pred_fallthru
          _
        // Predicated region
        $region273: #{tpu_custom_call.1} parent=31 // pred_check
          _
        $region274: #{tpu_custom_call.1} parent=31 // pred_check_branch
          %614 = sbr.rel (0) target = $region276
        $region275: #{tpu_custom_call.1} parent=31 // pred_region
          %615 = vsyncadd [#allocation4], 16
        $region276: #{tpu_custom_call.1} parent=31 // pred_fallthru
          _
        %v616 = vld [vmem:[%s230] sm:$0xff]
        %v617 = vlaneseq
        %v618 = vand.u32 %v617, 127
        %619 = vset.pattern.permute.xlu0 0
        %620 = vperm.xlu0 %619, %v616
        %v621 = vpop.permute.xlu0 %620
        %vm622 = vcmp.eq.s32.totalorder %v621, %v618
        %v623 = vsel %vm622, 1, 0
        %v624 = vcvt.s32.f32 %v623
        %v625 = vadd.f32 %v624, 0.0
        %626 = vset.pattern.permute.xlu0 1
        %627 = vperm.xlu0 %626, %v616
        %v628 = vpop.permute.xlu0 %627
        %vm629 = vcmp.eq.s32.totalorder %v628, %v618
        %v630 = vsel %vm629, 1, 0
        %v631 = vcvt.s32.f32 %v630
        %v632 = vadd.f32 %v625, %v631
        %633 = vset.pattern.permute.xlu0 2
        %634 = vperm.xlu0 %633, %v616
        %v635 = vpop.permute.xlu0 %634
        %vm636 = vcmp.eq.s32.totalorder %v635, %v618
        %v637 = vsel %vm636, 1, 0
        %v638 = vcvt.s32.f32 %v637
        %v639 = vadd.f32 %v632, %v638
        %v640 = vld [vmem:[#allocation7] sm:$0xff]
        %v641 = vld [vmem:[#allocation7 + $0x8] sm:$0xff]
        %v642 = vld [vmem:[#allocation7 + $0x10] sm:$0xff]
        %v643 = vld [vmem:[#allocation7 + $0x18] sm:$0xff]
        %v644 = vld [vmem:[#allocation7 + $0x20] sm:$0xff]
        %v645 = vld [vmem:[#allocation7 + $0x28] sm:$0xff]
        %v646 = vld [vmem:[#allocation7 + $0x30] sm:$0xff]
        %v647 = vld [vmem:[#allocation7 + $0x38] sm:$0xff]
        %v648 = vld [vmem:[#allocation7 + $0x40] sm:$0xff]
        %v649 = vld [vmem:[#allocation7 + $0x48] sm:$0xff]
        %v650 = vld [vmem:[#allocation7 + $0x50] sm:$0xff]
        %v651 = vld [vmem:[#allocation7 + $0x58] sm:$0xff]
        %v652 = vld [vmem:[#allocation7 + $0x60] sm:$0xff]
        %v653 = vld [vmem:[#allocation7 + $0x68] sm:$0xff]
        %v654 = vld [vmem:[#allocation7 + $0x70] sm:$0xff]
        %v655 = vld [vmem:[#allocation7 + $0x78] sm:$0xff]
        %656 = vmatprep.subr.mxu0 0.0
        %657 = vmatpush1.msra.mxu0 %v640
        %658 = vmatprep.subr.mxu0 0.0
        %659 = vmatpush1.msra.mxu0 %v641
        %660 = vmatprep.subr.mxu0 0.0
        %661 = vmatpush1.msra.mxu0 %v642
        %662 = vmatprep.subr.mxu0 0.0
        %663 = vmatpush1.msra.mxu0 %v643
        %664 = vmatprep.subr.mxu0 0.0
        %665 = vmatpush1.msra.mxu0 %v644
        %666 = vmatprep.subr.mxu0 0.0
        %667 = vmatpush1.msra.mxu0 %v645
        %668 = vmatprep.subr.mxu0 0.0
        %669 = vmatpush1.msra.mxu0 %v646
        %670 = vmatprep.subr.mxu0 0.0
        %671 = vmatpush1.msra.mxu0 %v647
        %672 = vmatprep.subr.mxu0 0.0
        %673 = vmatpush1.msra.mxu0 %v648
        %674 = vmatprep.subr.mxu0 0.0
        %675 = vmatpush1.msra.mxu0 %v649
        %676 = vmatprep.subr.mxu0 0.0
        %677 = vmatpush1.msra.mxu0 %v650
        %678 = vmatprep.subr.mxu0 0.0
        %679 = vmatpush1.msra.mxu0 %v651
        %680 = vmatprep.subr.mxu0 0.0
        %681 = vmatpush1.msra.mxu0 %v652
        %682 = vmatprep.subr.mxu0 0.0
        %683 = vmatpush1.msra.mxu0 %v653
        %684 = vmatprep.subr.mxu0 0.0
        %685 = vmatpush1.msra.mxu0 %v654
        %686 = vmatprep.subr.mxu0 0.0
        %687 = vmatpush1.msra.mxu0 %v655
        %688 = vmatprep.subr.mxu0 0.0
        %689 = vmatpush1.msra.mxu0 0.0
        %690 = vmatprep.subr.mxu0 0.0
        %691 = vmatpush1.msra.mxu0 0.0
        %692 = vmatprep.subr.mxu0 0.0
        %693 = vmatpush1.msra.mxu0 0.0
        %694 = vmatprep.subr.mxu0 0.0
        %695 = vmatpush1.msra.mxu0 0.0
        %696 = vmatprep.subr.mxu0 0.0
        %697 = vmatpush1.msra.mxu0 0.0
        %698 = vmatprep.subr.mxu0 0.0
        %699 = vmatpush1.msra.mxu0 0.0
        %700 = vmatprep.subr.mxu0 0.0
        %701 = vmatpush1.msra.mxu0 0.0
        %702 = vmatprep.subr.mxu0 0.0
        %703 = vmatpush1.msra.mxu0 0.0
        %704 = vmatprep.subr.mxu0 0.0
        %705 = vmatpush1.msra.mxu0 0.0
        %706 = vmatprep.subr.mxu0 0.0
        %707 = vmatpush1.msra.mxu0 0.0
        %708 = vmatprep.subr.mxu0 0.0
        %709 = vmatpush1.msra.mxu0 0.0
        %710 = vmatprep.subr.mxu0 0.0
        %711 = vmatpush1.msra.mxu0 0.0
        %712 = vmatprep.subr.mxu0 0.0
        %713 = vmatpush1.msra.mxu0 0.0
        %714 = vmatprep.subr.mxu0 0.0
        %715 = vmatpush1.msra.mxu0 0.0
        %716 = vmatprep.subr.mxu0 0.0
        %717 = vmatpush1.msra.mxu0 0.0
        %718 = vmatprep.subr.mxu0 0.0
        %719 = vmatpush1.msra.mxu0 0.0
        %720 = vmatprep.mubr.f32.mxu0 0.0
        %721 = vmatmul.mubr.f32.gmra.mrb[0].mxu0 %v639
        %v722 = vpop.f32.mrb[0].mxu0
        %v723 = vadd.f32 0.0, %v722
        %v724 = vpop.f32.mrb[0].mxu0
        %725 = vdwg.mxu0
        %v726 = vld [vmem:[%s223] sm:$0xff]
        %v727 = vadd.f32 %v726, %v723
        %728 = vst [vmem:[#allocation3] sm:$0xff] %v727
        %s729 = smul.u32 8, 1
        %s730 = sshll.u32 %s729, 4
        %731 = dma.done [#allocation4], %s730
        %v732 = vld [vmem:[#allocation2] sm:$0xff]
        %v733 = vld [vmem:[#allocation3] sm:$0xff]
        %v734 = vadd.f32 %v732, %v733
        %735 = vst [vmem:[%s219] sm:$0xff] %v734
        %s736 = sand.u32 %s123, 1
        %s737 = scalar_lea.sflag [#allocation9], %s736
        %s738 = sand.u32 %s123, 1
        %s739 = smul.addr %s738, 8
        %s740 = scalar_lea.vmem [#allocation10], %s739
        // Predicated region
        $region277: #{tpu_custom_call.1} parent=31 // pred_check
          %p741 = pneg %p133
        $region278: #{tpu_custom_call.1} parent=31 // pred_check_branch
          %743 = sbr.rel (%p741) target = $region280
        $region279: #{tpu_custom_call.1} parent=31 // pred_region
          %s745 = ssub.s32 128, 128
          %746 = vsyncadd %s737, %s745
          %s747 = sadd.s32 %s30, %s31
          %s748 = smul.addr %s747, 128
          %s749 = scalar_lea.hbm %s5, %s748
          %s751 = sshll.u32 %s740, 4
          %s752 = int_to_ptr.vmem [resolvable:$true] %s751
          %754 = dma.vmem_to_hbm [thread:$0]  %s752, 128, %s749, %s737
        $region280: #{tpu_custom_call.1} parent=31 // pred_fallthru
          _
      $region32: #{tpu_custom_call.1} parent=5 // pred_fallthru
        _
      %p755 = scmp.le.s32.totalorder 2, %s21
      // Predicated region
      $region281: #{tpu_custom_call.1} parent=5 // pred_check
        %p756 = pneg %p755
      $region282: #{tpu_custom_call.1} parent=5 // pred_check_branch
        %758 = sbr.rel (%p756) target = $region284
      $region283: #{tpu_custom_call.1} parent=5 // pred_region
        %s759 = ssub.s32 %s21, 2
        // Predicated region
        $region285: #{tpu_custom_call.1} parent=283 // pred_check
          %p760 = pneg %p139
        $region286: #{tpu_custom_call.1} parent=283 // pred_check_branch
          %762 = sbr.rel (%p760) target = $region288
        $region287: #{tpu_custom_call.1} parent=283 // pred_region
          %s763 = sand.u32 %s124, 1
          %s764 = scalar_lea.sflag [#allocation9], %s763
          %s765 = sand.u32 %s124, 1
          %s766 = smul.addr %s765, 8
          %s767 = scalar_lea.vmem [#allocation10], %s766
          %768 = dma.done %s764, 128
        $region288: #{tpu_custom_call.1} parent=283 // pred_fallthru
          _
      $region284: #{tpu_custom_call.1} parent=5 // pred_fallthru
        _
    $region6: #{tpu_custom_call.1} parent=1 // loop_footer
      %s25 = sadd.s32 1, %s21
    $region7: #{tpu_custom_call.1} parent=1 // loop_footer_branch
      %20 = sbr.rel target = $region3
    $region8: #{tpu_custom_call.1} parent=1 // loop_exit
      _
    %769 = vsyncpa [#allocation8], 1
    %s770 = scalar_lea.sflag [#allocation8], 1
    %771 = vsyncpa %s770, 1
    %772 = vsyncpa [#allocation9], 1
    %s773 = scalar_lea.sflag [#allocation9], 1
    %774 = vsyncpa %s773, 1
  %775 = vsyncmov [#allocation4]
  %s776 = vpop.sfrf %775
  %p777 = scmp.eq.s32.totalorder %s776, 0
  %p778 = pneg %p777
  %780 = shalt.err (%p778)
  %s781 = scalar_lea.sflag [#allocation4], 1
  %782 = vsyncmov %s781
  %s783 = vpop.sfrf %782
  %p784 = scmp.eq.s32.totalorder %s783, 0
  %p785 = pneg %p784
  %787 = shalt.err (%p785)

</llo_original>
